<compile_context>
chip_gen: v6e
topology: v6e:2x2x1
jax: 0.10.0
libtpu: 0.0.40
codegen_flags: <defaults>
</compile_context>

<pallas_src>
import functools
import math

import jax
import jax.numpy as jnp
from jax import lax
from jax.experimental import pallas as pl
from jax.experimental.pallas import tpu as pltpu

NF = 5          # number of sinusoid components (self.nf in the PyTorch module)
LANE = 128      # TPU lane width
SUBLANE = 8     # TPU sublane width (f32)

VMEM_BUDGET = 40 << 20          # working-set target, safe on v7x (64 MiB VMEM)
WEIGHT_RESIDENT_BYTES = 4 << 20  # keep full weight in VMEM below this size


def _round_up(v, m):
    return (v + m - 1) // m * m


def _footprint_bytes(tm, tn, d_in_p, d_out_p, weight_resident):
    """Approximate per-call VMEM working set (f32, double-buffered tiles)."""
    w_elems = 2 * d_out_p * d_in_p if weight_resident else 2 * tn * d_in_p
    elems = (2 * tm * d_in_p       # x row tile (double-buffered)
             + w_elems             # weight (resident or streamed tile)
             + 2 * d_out_p         # bias (resident)
             + 2 * tm * tn         # output tile (double-buffered)
             + 4 * tm * tn)        # z / sin-arg / acc compiler temporaries
    return 4 * elems


def _parasin_kernel(ws_ref, phis_ref, bs_ref,     # SMEM scalar params (NF,)
                    x_ref, w_ref, b_ref,          # VMEM tiles
                    o_ref,                        # output tile
                    *, is_first: bool, tn: int, col_axis: int,
                    weight_resident: bool):
    j = pl.program_id(col_axis)
    col = pl.multiple_of(j * tn, LANE)

    x = x_ref[...]                                # (tm, d_in_p)
    if weight_resident:
        w = w_ref[pl.ds(col, tn), :]              # (tn, d_in_p) slice of resident W
    else:
        w = w_ref[...]                            # streamed (tn, d_in_p) tile

    # z = x @ W^T + b.  Both LAST dims contract -> the transpose is folded into
    # the MXU contraction (no explicit transpose), f32 accumulation.
    z = lax.dot_general(x, w, dimension_numbers=(((1,), (1,)), ((), ())),
                        preferred_element_type=jnp.float32)   # (tm, tn)
    z = z + b_ref[:, pl.ds(col, tn)]              # bias broadcast (1, tn)

    # Hoist the SMEM scalar reads out of the unrolled NF loop.
    w_k = [ws_ref[k] for k in range(NF)]
    p_k = [phis_ref[k] for k in range(NF)]
    b_k = [bs_ref[k] for k in range(NF)]

    # Parametric sinusoidal activation: sum_k bs[k] * sin(ws[k] * z + phis[k]).
    acc = b_k[0] * jnp.sin(w_k[0] * z + p_k[0])
    for k in range(1, NF):                        # NF tiny & static -> unrolled
        acc = acc + b_k[k] * jnp.sin(w_k[k] * z + p_k[k])

    if not is_first:
        # Residual (valid only when in_features == out_features, as in PyTorch).
        acc = acc + x_ref[:, pl.ds(col, tn)].astype(jnp.float32)

    o_ref[...] = acc.astype(o_ref.dtype)


def parasin_forward(x, weight, bias, ws, phis, bs, *,
                    is_first: bool = False, tm: int = 512, tn=None,
                    weight_resident=None):
    """x: (N, D_in) f32; weight: (D_out, D_in); bias: (D_out,); ws/phis/bs: (NF,)."""
    n, d_in = x.shape
    d_out, d_in_w = weight.shape
    assert d_in_w == d_in
    if not is_first:
        assert d_in == d_out, "residual path requires in_features == out_features"

    # Lane-dense padding of feature dims, sublane-aligned row tiling.
    d_in_p = _round_up(d_in, LANE)
    d_out_p = _round_up(d_out, LANE)

    # ---- output-column tile: largest multiple of 128 dividing d_out_p (<=512).
    if tn is not None and tn % LANE == 0 and d_out_p % tn == 0:
        tn = int(tn)
    else:
        tn = next(c for c in (512, 384, 256, 128) if d_out_p % c == 0)

    # ---- row tile: large (amortizes ~0.35 us/step), sublane aligned.
    tm = _round_up(max(int(tm), SUBLANE), SUBLANE)
    tm = min(tm, _round_up(n, SUBLANE))

    # ---- weight residency decision (auto unless forced by caller).
    w_bytes = 4 * d_out_p * d_in_p
    if weight_resident is None:
        weight_resident = w_bytes <= WEIGHT_RESIDENT_BYTES
    weight_resident = bool(weight_resident)

    # ---- shrink tiles until the working set fits the (v7x-safe) VMEM budget.
    while _footprint_bytes(tm, tn, d_in_p, d_out_p, weight_resident) > VMEM_BUDGET:
        if tm > SUBLANE:
            tm = _round_up(tm // 2, SUBLANE)
        elif tn > LANE:
            tn = LANE
        else:
            break  # minimal tiles; let the compiler have the final word

    # ---- make sure a parallel axis has >=2 steps so both v7x TCs get work.
    if _round_up(n, tm) // tm == 1 and d_out_p // tn == 1 and n > SUBLANE:
        tm = _round_up(-(-n // 2), SUBLANE)

    n_p = _round_up(n, tm)
    rows = n_p // tm
    cols = d_out_p // tn

    # ---- zero-pad operands; padded rows/columns are sliced off after the call.
    x_p = x if (n_p, d_in_p) == (n, d_in) else jnp.pad(
        x, ((0, n_p - n), (0, d_in_p - d_in)))
    w_p = weight if (d_out_p, d_in_p) == (d_out, d_in) else jnp.pad(
        weight, ((0, d_out_p - d_out), (0, d_in_p - d_in)))
    b_p = bias if d_out_p == d_out else jnp.pad(bias, (0, d_out_p - d_out))
    b_p = b_p.reshape(1, d_out_p)

    smem_spec = pl.BlockSpec(memory_space=pltpu.SMEM)
    if weight_resident:
        # Rows outer, columns inner: x streamed once, weight/bias DMA'd once.
        grid = (rows, cols)
        col_axis = 1
        x_spec = pl.BlockSpec((tm, d_in_p), lambda i, j: (i, 0))
        w_spec = pl.BlockSpec((d_out_p, d_in_p), lambda i, j: (0, 0))
        b_spec = pl.BlockSpec((1, d_out_p), lambda i, j: (0, 0))
        o_spec = pl.BlockSpec((tm, tn), lambda i, j: (i, j))
    else:
        # Columns outer, rows inner: each weight tile streamed exactly once.
        grid = (cols, rows)
        col_axis = 0
        x_spec = pl.BlockSpec((tm, d_in_p), lambda j, i: (i, 0))
        w_spec = pl.BlockSpec((tn, d_in_p), lambda j, i: (j, 0))
        b_spec = pl.BlockSpec((1, d_out_p), lambda j, i: (0, 0))
        o_spec = pl.BlockSpec((tm, tn), lambda j, i: (i, j))

    footprint = _footprint_bytes(tm, tn, d_in_p, d_out_p, weight_resident)
    vmem_limit = int(min(max(footprint + (8 << 20), 32 << 20), 48 << 20))

    kernel = functools.partial(_parasin_kernel, is_first=is_first, tn=tn,
                               col_axis=col_axis,
                               weight_resident=weight_resident)

    grid_spec = pltpu.PrefetchScalarGridSpec(
        num_scalar_prefetch=0,
        grid=grid,
        in_specs=[smem_spec, smem_spec, smem_spec,   # ws, phis, bs
                  x_spec, w_spec, b_spec],
        out_specs=o_spec,
    )

    out_p = pl.pallas_call(
        kernel,
        out_shape=jax.ShapeDtypeStruct((n_p, d_out_p), x.dtype),
        grid_spec=grid_spec,
        compiler_params=pltpu.CompilerParams(
            dimension_semantics=("parallel", "parallel"),
            vmem_limit_bytes=vmem_limit),
    )(ws, phis, bs, x_p, w_p, b_p)

    if (n_p, d_out_p) != (n, d_out):
        out_p = out_p[:n, :d_out]
    return out_p


def parasin_reference(x, weight, bias, ws, phis, bs, *, is_first=False):
    z = jnp.dot(x, weight.T, precision=jax.lax.Precision.HIGHEST) + bias
    y = (bs * jnp.sin(ws * z[..., None] + phis)).sum(axis=-1)
    return y if is_first else y + x


def _init_params(key, d_in, d_out, omega_0=30.0):
    """nn.Linear + Parasin.init_params() style deterministic init in JAX."""
    kw, kb, kws, kphi, klap = jax.random.split(key, 5)
    lim = 1.0 / math.sqrt(d_in)
    weight = jax.random.uniform(kw, (d_out, d_in), minval=-lim, maxval=lim,
                                dtype=jnp.float32)
    bias = jax.random.uniform(kb, (d_out,), minval=-lim, maxval=lim,
                              dtype=jnp.float32)
    ws = omega_0 * jax.random.uniform(kws, (NF,), dtype=jnp.float32)
    phis = -math.pi + 2.0 * math.pi * jax.random.uniform(kphi, (NF,),
                                                         dtype=jnp.float32)
    diversity_y = 1.0 / (2 * NF)
    u = jax.random.uniform(klap, (NF,), minval=-0.5 + 1e-6, maxval=0.5,
                           dtype=jnp.float32)
    laplace = -diversity_y * jnp.sign(u) * jnp.log1p(-2.0 * jnp.abs(u))
    bs = jnp.sign(laplace) * jnp.sqrt(jnp.abs(laplace))
    return weight, bias, ws, phis, bs


if __name__ == "__main__":
    key = jax.random.PRNGKey(0)
    k1, k2, k3, k4 = jax.random.split(key, 4)

    # --- check 1: small hidden layer + residual; triggers the 2-TC row split ---
    N, D = 16, 32
    x = jax.random.normal(k1, (N, D), dtype=jnp.float32)
    weight, bias, ws, phis, bs = _init_params(k2, D, D)
    out = jax.block_until_ready(
        parasin_forward(x, weight, bias, ws, phis, bs, is_first=False))
    ref = parasin_reference(x, weight, bias, ws, phis, bs, is_first=False)
    assert out.shape == ref.shape
    assert jnp.allclose(out, ref, atol=5e-4, rtol=5e-4), "mismatch (residual)"

    # --- check 2: first layer (no residual), rectangular in/out ---
    x1 = jax.random.normal(k3, (N, 24), dtype=jnp.float32)
    w1, b1, ws1, ph1, bs1 = _init_params(k4, 24, 40)
    out1 = jax.block_until_ready(
        parasin_forward(x1, w1, b1, ws1, ph1, bs1, is_first=True))
    ref1 = parasin_reference(x1, w1, b1, ws1, ph1, bs1, is_first=True)
    assert out1.shape == ref1.shape
    assert jnp.allclose(out1, ref1, atol=5e-4, rtol=5e-4), "mismatch (is_first)"

    # --- check 3: multi-tile grid (row tail + column tiling + residual), weight resident ---
    kk1, kk2 = jax.random.split(jax.random.PRNGKey(1))
    N2, D2 = 272, 200     # pads to (512, 256); tm=256, tn=128 -> 2x2 grid
    x2 = jax.random.normal(kk1, (N2, D2), dtype=jnp.float32)
    w2, b2, ws2, ph2, bs2 = _init_params(kk2, D2, D2)
    out2 = jax.block_until_ready(
        parasin_forward(x2, w2, b2, ws2, ph2, bs2,
                        is_first=False, tm=256, tn=128))
    ref2 = parasin_reference(x2, w2, b2, ws2, ph2, bs2, is_first=False)
    assert out2.shape == ref2.shape
    assert jnp.allclose(out2, ref2, atol=3e-3, rtol=3e-3), "mismatch (multi-tile)"

    # --- check 4: streamed (non-resident) weight path, columns-outer grid ---
    out3 = jax.block_until_ready(
        parasin_forward(x2, w2, b2, ws2, ph2, bs2,
                        is_first=False, tm=256, tn=128, weight_resident=False))
    assert out3.shape == ref2.shape
    assert jnp.allclose(out3, ref2, atol=3e-3, rtol=3e-3), "mismatch (streamed W)"

    print("KERNEL_OK")
</pallas_src>

<mosaic_0001>
module attributes {stable_mosaic.version = 11 : i64} {
  func.func @_parasin_kernel(%arg0: i32, %arg1: i32, %arg2: memref<5xf32, #tpu.memory_space<smem>>, %arg3: memref<5xf32, #tpu.memory_space<smem>>, %arg4: memref<5xf32, #tpu.memory_space<smem>>, %arg5: memref<8x128xf32, #tpu.memory_space<vmem>>, %arg6: memref<128x128xf32, #tpu.memory_space<vmem>>, %arg7: memref<1x128xf32, #tpu.memory_space<vmem>>, %arg8: memref<8x128xf32, #tpu.memory_space<vmem>>) attributes {dimension_semantics = [#tpu.dimension_semantics<parallel>, #tpu.dimension_semantics<parallel>], iteration_bounds = array<i64: 2, 1>, scalar_prefetch = 0 : i64, scratch_operands = 0 : i64, tpu.core_type = #tpu.core_type<tc>, window_params = [{transform_indices = @transform_0, window_bounds = array<i64: 5>}, {transform_indices = @transform_1, window_bounds = array<i64: 5>}, {transform_indices = @transform_2, window_bounds = array<i64: 5>}, {transform_indices = @transform_3, window_bounds = array<i64: 8, 128>}, {pipeline_mode = #tpu.pipeline_mode<synchronous>, transform_indices = @transform_4, window_bounds = array<i64: 128, 128>}, {pipeline_mode = #tpu.pipeline_mode<synchronous>, transform_indices = @transform_5, window_bounds = array<i64: 1, 128>}, {transform_indices = @transform_6, window_bounds = array<i64: 8, 128>}]} {
    %c128_i32 = arith.constant 128 : i32
    %0 = arith.muli %arg1, %c128_i32 : i32
    %1 = tpu.assume_multiple %0, 128 : i32
    %c0 = arith.constant 0 : index
    %c0_0 = arith.constant 0 : index
    %2 = vector.load %arg5[%c0, %c0_0] : memref<8x128xf32, #tpu.memory_space<vmem>>, vector<8x128xf32>
    %3 = arith.index_cast %1 : i32 to index
    %c0_1 = arith.constant 0 : index
    %4 = vector.load %arg6[%3, %c0_1] : memref<128x128xf32, #tpu.memory_space<vmem>>, vector<128x128xf32>
    %cst = arith.constant dense<0.000000e+00> : vector<8x128xf32>
    %5 = tpu.matmul %2, %4, %cst {dimension_numbers = #tpu.dot_dimension_numbers<[1], [1], [0], [0], [0, 0, 1, 0], [], []>} : vector<8x128xf32>, vector<128x128xf32>, vector<8x128xf32> -> vector<8x128xf32>
    %c0_2 = arith.constant 0 : index
    %6 = arith.index_cast %1 : i32 to index
    %7 = vector.load %arg7[%c0_2, %6] : memref<1x128xf32, #tpu.memory_space<vmem>>, vector<1x128xf32>
    %8 = vector.broadcast %7 : vector<1x128xf32> to vector<8x128xf32>
    %9 = arith.addf %5, %8 : vector<8x128xf32>
    %c0_3 = arith.constant 0 : index
    %10 = memref.load %arg2[%c0_3] : memref<5xf32, #tpu.memory_space<smem>>
    %c1 = arith.constant 1 : index
    %11 = memref.load %arg2[%c1] : memref<5xf32, #tpu.memory_space<smem>>
    %c2 = arith.constant 2 : index
    %12 = memref.load %arg2[%c2] : memref<5xf32, #tpu.memory_space<smem>>
    %c3 = arith.constant 3 : index
    %13 = memref.load %arg2[%c3] : memref<5xf32, #tpu.memory_space<smem>>
    %c4 = arith.constant 4 : index
    %14 = memref.load %arg2[%c4] : memref<5xf32, #tpu.memory_space<smem>>
    %c0_4 = arith.constant 0 : index
    %15 = memref.load %arg3[%c0_4] : memref<5xf32, #tpu.memory_space<smem>>
    %c1_5 = arith.constant 1 : index
    %16 = memref.load %arg3[%c1_5] : memref<5xf32, #tpu.memory_space<smem>>
    %c2_6 = arith.constant 2 : index
    %17 = memref.load %arg3[%c2_6] : memref<5xf32, #tpu.memory_space<smem>>
    %c3_7 = arith.constant 3 : index
    %18 = memref.load %arg3[%c3_7] : memref<5xf32, #tpu.memory_space<smem>>
    %c4_8 = arith.constant 4 : index
    %19 = memref.load %arg3[%c4_8] : memref<5xf32, #tpu.memory_space<smem>>
    %c0_9 = arith.constant 0 : index
    %20 = memref.load %arg4[%c0_9] : memref<5xf32, #tpu.memory_space<smem>>
    %c1_10 = arith.constant 1 : index
    %21 = memref.load %arg4[%c1_10] : memref<5xf32, #tpu.memory_space<smem>>
    %c2_11 = arith.constant 2 : index
    %22 = memref.load %arg4[%c2_11] : memref<5xf32, #tpu.memory_space<smem>>
    %c3_12 = arith.constant 3 : index
    %23 = memref.load %arg4[%c3_12] : memref<5xf32, #tpu.memory_space<smem>>
    %c4_13 = arith.constant 4 : index
    %24 = memref.load %arg4[%c4_13] : memref<5xf32, #tpu.memory_space<smem>>
    %25 = vector.broadcast %10 : f32 to vector<8x128xf32>
    %26 = arith.mulf %25, %9 : vector<8x128xf32>
    %27 = vector.broadcast %15 : f32 to vector<8x128xf32>
    %28 = arith.addf %26, %27 : vector<8x128xf32>
    %29 = math.sin %28 : vector<8x128xf32>
    %30 = vector.broadcast %20 : f32 to vector<8x128xf32>
    %31 = arith.mulf %30, %29 : vector<8x128xf32>
    %32 = vector.broadcast %11 : f32 to vector<8x128xf32>
    %33 = arith.mulf %32, %9 : vector<8x128xf32>
    %34 = vector.broadcast %16 : f32 to vector<8x128xf32>
    %35 = arith.addf %33, %34 : vector<8x128xf32>
    %36 = math.sin %35 : vector<8x128xf32>
    %37 = vector.broadcast %21 : f32 to vector<8x128xf32>
    %38 = arith.mulf %37, %36 : vector<8x128xf32>
    %39 = arith.addf %31, %38 : vector<8x128xf32>
    %40 = vector.broadcast %12 : f32 to vector<8x128xf32>
    %41 = arith.mulf %40, %9 : vector<8x128xf32>
    %42 = vector.broadcast %17 : f32 to vector<8x128xf32>
    %43 = arith.addf %41, %42 : vector<8x128xf32>
    %44 = math.sin %43 : vector<8x128xf32>
    %45 = vector.broadcast %22 : f32 to vector<8x128xf32>
    %46 = arith.mulf %45, %44 : vector<8x128xf32>
    %47 = arith.addf %39, %46 : vector<8x128xf32>
    %48 = vector.broadcast %13 : f32 to vector<8x128xf32>
    %49 = arith.mulf %48, %9 : vector<8x128xf32>
    %50 = vector.broadcast %18 : f32 to vector<8x128xf32>
    %51 = arith.addf %49, %50 : vector<8x128xf32>
    %52 = math.sin %51 : vector<8x128xf32>
    %53 = vector.broadcast %23 : f32 to vector<8x128xf32>
    %54 = arith.mulf %53, %52 : vector<8x128xf32>
    %55 = arith.addf %47, %54 : vector<8x128xf32>
    %56 = vector.broadcast %14 : f32 to vector<8x128xf32>
    %57 = arith.mulf %56, %9 : vector<8x128xf32>
    %58 = vector.broadcast %19 : f32 to vector<8x128xf32>
    %59 = arith.addf %57, %58 : vector<8x128xf32>
    %60 = math.sin %59 : vector<8x128xf32>
    %61 = vector.broadcast %24 : f32 to vector<8x128xf32>
    %62 = arith.mulf %61, %60 : vector<8x128xf32>
    %63 = arith.addf %55, %62 : vector<8x128xf32>
    %c0_14 = arith.constant 0 : index
    %64 = arith.index_cast %1 : i32 to index
    %65 = vector.load %arg5[%c0_14, %64] : memref<8x128xf32, #tpu.memory_space<vmem>>, vector<8x128xf32>
    %66 = arith.addf %63, %65 : vector<8x128xf32>
    %c0_15 = arith.constant 0 : index
    %c0_16 = arith.constant 0 : index
    %67 = vector.load %arg8[%c0_15, %c0_16] : memref<8x128xf32, #tpu.memory_space<vmem>>, vector<8x128xf32>
    tpu.vector_store %arg8[%c0_15, %c0_16], %66 {strides = array<i32>} : memref<8x128xf32, #tpu.memory_space<vmem>>, vector<8x128xf32>,
    return
  }
  func.func @transform_0(%arg0: i32, %arg1: i32) -> i32 {
    %c0_i32 = arith.constant 0 : i32
    %c0_i32_0 = arith.constant 0 : i32
    return %c0_i32 : i32
  }
  func.func @transform_1(%arg0: i32, %arg1: i32) -> i32 {
    %c0_i32 = arith.constant 0 : i32
    %c0_i32_0 = arith.constant 0 : i32
    return %c0_i32 : i32
  }
  func.func @transform_2(%arg0: i32, %arg1: i32) -> i32 {
    %c0_i32 = arith.constant 0 : i32
    %c0_i32_0 = arith.constant 0 : i32
    return %c0_i32 : i32
  }
  func.func @transform_3(%arg0: i32, %arg1: i32) -> (i32, i32) {
    %c0_i32 = arith.constant 0 : i32
    %c0_i32_0 = arith.constant 0 : i32
    return %arg0, %c0_i32 : i32, i32
  }
  func.func @transform_4(%arg0: i32, %arg1: i32) -> (i32, i32) {
    %c0_i32 = arith.constant 0 : i32
    %c0_i32_0 = arith.constant 0 : i32
    %c0_i32_1 = arith.constant 0 : i32
    return %c0_i32, %c0_i32_0 : i32, i32
  }
  func.func @transform_5(%arg0: i32, %arg1: i32) -> (i32, i32) {
    %c0_i32 = arith.constant 0 : i32
    %c0_i32_0 = arith.constant 0 : i32
    %c0_i32_1 = arith.constant 0 : i32
    return %c0_i32, %c0_i32_0 : i32, i32
  }
  func.func @transform_6(%arg0: i32, %arg1: i32) -> (i32, i32) {
    %c0_i32 = arith.constant 0 : i32
    return %arg0, %arg1 : i32, i32
  }
}

</mosaic_0001>

<llo_original>
// kernel: tpu_custom_call.1
$region0: #{tpu_custom_call.1}
  #allocation0 [shape = 'u32[]', space=smem, size = 0x4, offset = 0x4, fixed_abs, tag = 'smem constant byte address 0x4 - core index']
  #allocation1 [shape = 'u32[144,128]{1,0:T(1,128)}', space=vmem, size = 0x12000, scoped, tag = 'internal scratch']
  %s0 = inlined_call_operand.hbm [shape: f32[5], index: 0, kind: input, shape index: {}]
  %s1 = inlined_call_operand.vmem [shape: f32[5], index: 1, kind: input, shape index: {}]
  %s2 = inlined_call_operand.vmem [shape: f32[5], index: 2, kind: input, shape index: {}]
  %s3 = inlined_call_operand.hbm [shape: f32[16,128], index: 3, kind: input, shape index: {}]
  %s4 = inlined_call_operand.hbm [shape: f32[128,128], index: 4, kind: input, shape index: {}]
  %s5 = inlined_call_operand.vmem [shape: f32[1,128], index: 5, kind: input, shape index: {}]
  %s6 = inlined_call_operand.hbm [shape: f32[16,128], index: 6, kind: output, shape index: {}]
  %s7 = sld [smem:[#allocation0]]
  $region77: #{tpu_custom_call.1} parent=0
    _
  %s9 = ssub.s32 1, %s7
  %s10 = scalar_select 0, %s9, %s7
  $region1: #{tpu_custom_call.1} parent=0
    #allocation2 [shape = 'u8[512]{0}', space=smem, size = 0x200, scoped, tag = 'input window, operand 0, single buffered']
    #allocation3 [shape = 's32[2]{0}', space=sflag, size = 0x8, scoped, tag = 'scoped memory for tpu_custom_call.1']
    #allocation4 [shape = 's32[2]{0}', space=sflag, size = 0x8, scoped, tag = 'scoped memory for tpu_custom_call.1']
    #allocation5 [shape = 's32[2]{0}', space=sflag, size = 0x8, scoped, tag = 'scoped memory for tpu_custom_call.1']
    #allocation6 [shape = 's32[2]{0}', space=sflag, size = 0x8, scoped, tag = 'scoped memory for tpu_custom_call.1']
    #allocation7 [shape = 'u8[512]{0}', space=smem, size = 0x200, scoped, tag = 'input window, operand 1, single buffered']
    #allocation8 [shape = 'u8[512]{0}', space=smem, size = 0x200, scoped, tag = 'input window, operand 2, single buffered']
    #allocation9 [shape = 's32[1]{0}', space=sflag, size = 0x4, scoped, tag = 'scoped memory for tpu_custom_call.1']
    #allocation10 [shape = 'u8[8192]{0}', space=vmem, size = 0x2000, scoped, tag = 'input window, operand 3']
    #allocation11 [shape = 'u8[65536]{0}', space=vmem, size = 0x10000, scoped, tag = 'input window, operand 4, single buffered']
    #allocation12 [shape = 's32[1]{0}', space=sflag, size = 0x4, scoped, tag = 'scoped memory for tpu_custom_call.1']
    #allocation13 [shape = 'u8[8192]{0}', space=vmem, size = 0x2000, scoped, tag = 'output window, operand 0']
    %11 = vsyncpa [#allocation5], 0
    %12 = vsyncpa [#allocation6], 0
    %13 = vsyncpa [#allocation9], 0
    %14 = vsyncpa [#allocation3], 0
    %s15 = scalar_lea.sflag [#allocation3], 1
    %16 = vsyncpa %s15, 0
    %17 = vsyncpa [#allocation12], 0
    %18 = vsyncpa [#allocation4], 0
    %s19 = scalar_lea.sflag [#allocation4], 1
    %20 = vsyncpa %s19, 0
    loop: start=0, step=1, limit=4
    $region2: #{tpu_custom_call.1} parent=1 // loop_pre_header
      _
    $region3: #{tpu_custom_call.1} parent=1 // loop_header
      %s22 = sphi 0, %s26
      %p23 = scmp.ge.s32.totalorder %s22, 4
      %s29 = sphi 0, %s41
      %s30 = sphi 0, %s37
      %s31 = sphi 0, %s29
      %s32 = sphi 0, %s30
      %s33 = sphi 0, %s31
      %s34 = sphi 0, %s32
      %s42 = sphi 0, %s42
      %s44 = sphi 0, %s42
      %s45 = sphi 0, %s44
      %s59 = sphi 0, %s45
      %s63 = sphi 0, %s63
      %s65 = sphi 0, %s63
      %s66 = sphi 0, %s65
      %s80 = sphi 0, %s66
      %s84 = sphi 0, %s84
      %s86 = sphi 0, %s84
      %s87 = sphi 0, %s86
      %s101 = sphi 0, %s87
      %s107 = sphi 0, %s109
      %s110 = sphi 0, %s107
      %s111 = sphi 0, %s110
      %s127 = sphi 0, %s111
      %s131 = sphi 0, %s131
      %s133 = sphi 0, %s131
      %s134 = sphi 0, %s133
      %s148 = sphi 0, %s134
      %s152 = sphi 0, %s152
      %s154 = sphi 0, %s152
      %s155 = sphi 0, %s154
      %s169 = sphi 0, %s155
      %s177 = sphi 0, %s179
      %s180 = sphi 0, %s177
      %s181 = sphi 0, %s180
      %s197 = sphi 0, %s181
    $region4: #{tpu_custom_call.1} parent=1 // loop_header_branch
      %25 = sbr.rel (%p23) target = $region8
    $region5: #{tpu_custom_call.1} parent=1 // loop_body
      %s27 = ssub.s32 %s22, 1
      %s28 = ssub.s32 %s22, 2
      %s35 = sadd.s32 1, %s30
      %p36 = scmp.ge.s32.totalorder %s35, 1
      %s37 = scalar_select %p36, 0, %s35
      %s38 = sadd.s32 1, %s29
      %s39 = scalar_select %p36, %s38, %s29
      %p40 = scmp.ge.s32.totalorder %s39, 2
      %s41 = scalar_select %p40, 0, %s39
      %s43 = sadd.s32 %s42, 1
      %p46 = scmp.eq.s32.totalorder %s22, 1
      %p47 = scmp.ne.s32.totalorder %s42, %s44
      %p48 = scmp.eq.s32.totalorder %s22, 0
      %p49 = por %p47, %p48
      %p50 = scmp.ne.s32.totalorder %s42, %s44
      %p51 = scmp.eq.s32.totalorder %s27, 1
      %p52 = por %p50, %p51
      %p53 = scmp.ne.s32.totalorder %s44, %s45
      %p54 = scmp.eq.s32.totalorder %s27, 0
      %p55 = por %p53, %p54
      %p56 = scmp.ne.s32.totalorder %s44, %s45
      %p57 = scmp.eq.s32.totalorder %s28, 1
      %p58 = por %p56, %p57
      %p60 = scmp.ne.s32.totalorder %s45, %s59
      %p61 = scmp.eq.s32.totalorder %s28, 0
      %p62 = por %p60, %p61
      %s64 = sadd.s32 %s63, 1
      %p67 = scmp.eq.s32.totalorder %s22, 1
      %p68 = scmp.ne.s32.totalorder %s63, %s65
      %p69 = scmp.eq.s32.totalorder %s22, 0
      %p70 = por %p68, %p69
      %p71 = scmp.ne.s32.totalorder %s63, %s65
      %p72 = scmp.eq.s32.totalorder %s27, 1
      %p73 = por %p71, %p72
      %p74 = scmp.ne.s32.totalorder %s65, %s66
      %p75 = scmp.eq.s32.totalorder %s27, 0
      %p76 = por %p74, %p75
      %p77 = scmp.ne.s32.totalorder %s65, %s66
      %p78 = scmp.eq.s32.totalorder %s28, 1
      %p79 = por %p77, %p78
      %p81 = scmp.ne.s32.totalorder %s66, %s80
      %p82 = scmp.eq.s32.totalorder %s28, 0
      %p83 = por %p81, %p82
      %s85 = sadd.s32 %s84, 1
      %p88 = scmp.eq.s32.totalorder %s22, 1
      %p89 = scmp.ne.s32.totalorder %s84, %s86
      %p90 = scmp.eq.s32.totalorder %s22, 0
      %p91 = por %p89, %p90
      %p92 = scmp.ne.s32.totalorder %s84, %s86
      %p93 = scmp.eq.s32.totalorder %s27, 1
      %p94 = por %p92, %p93
      %p95 = scmp.ne.s32.totalorder %s86, %s87
      %p96 = scmp.eq.s32.totalorder %s27, 0
      %p97 = por %p95, %p96
      %p98 = scmp.ne.s32.totalorder %s86, %s87
      %p99 = scmp.eq.s32.totalorder %s28, 1
      %p100 = por %p98, %p99
      %p102 = scmp.ne.s32.totalorder %s87, %s101
      %p103 = scmp.eq.s32.totalorder %s28, 0
      %p104 = por %p102, %p103
      %s105 = ssub.s32 %s29, %s41
      %p106 = scmp.eq.s32.totalorder %s105, 0
      %s108 = sadd.s32 %s107, 1
      %s109 = scalar_select %p106, %s107, %s108
      %p112 = pneg %p106
      %p113 = scmp.eq.s32.totalorder %s22, 1
      %p114 = por %p112, %p113
      %p115 = scmp.ne.s32.totalorder %s107, %s110
      %p116 = scmp.eq.s32.totalorder %s22, 0
      %p117 = por %p115, %p116
      %p118 = scmp.ne.s32.totalorder %s107, %s110
      %p119 = scmp.eq.s32.totalorder %s27, 1
      %p120 = por %p118, %p119
      %p121 = scmp.ne.s32.totalorder %s110, %s111
      %p122 = scmp.eq.s32.totalorder %s27, 0
      %p123 = por %p121, %p122
      %p124 = scmp.ne.s32.totalorder %s110, %s111
      %p125 = scmp.eq.s32.totalorder %s28, 1
      %p126 = por %p124, %p125
      %p128 = scmp.ne.s32.totalorder %s111, %s127
      %p129 = scmp.eq.s32.totalorder %s28, 0
      %p130 = por %p128, %p129
      %s132 = sadd.s32 %s131, 1
      %p135 = scmp.eq.s32.totalorder %s22, 1
      %p136 = scmp.ne.s32.totalorder %s131, %s133
      %p137 = scmp.eq.s32.totalorder %s22, 0
      %p138 = por %p136, %p137
      %p139 = scmp.ne.s32.totalorder %s131, %s133
      %p140 = scmp.eq.s32.totalorder %s27, 1
      %p141 = por %p139, %p140
      %p142 = scmp.ne.s32.totalorder %s133, %s134
      %p143 = scmp.eq.s32.totalorder %s27, 0
      %p144 = por %p142, %p143
      %p145 = scmp.ne.s32.totalorder %s133, %s134
      %p146 = scmp.eq.s32.totalorder %s28, 1
      %p147 = por %p145, %p146
      %p149 = scmp.ne.s32.totalorder %s134, %s148
      %p150 = scmp.eq.s32.totalorder %s28, 0
      %p151 = por %p149, %p150
      %s153 = sadd.s32 %s152, 1
      %p156 = scmp.eq.s32.totalorder %s22, 1
      %p157 = scmp.ne.s32.totalorder %s152, %s154
      %p158 = scmp.eq.s32.totalorder %s22, 0
      %p159 = por %p157, %p158
      %p160 = scmp.ne.s32.totalorder %s152, %s154
      %p161 = scmp.eq.s32.totalorder %s27, 1
      %p162 = por %p160, %p161
      %p163 = scmp.ne.s32.totalorder %s154, %s155
      %p164 = scmp.eq.s32.totalorder %s27, 0
      %p165 = por %p163, %p164
      %p166 = scmp.ne.s32.totalorder %s154, %s155
      %p167 = scmp.eq.s32.totalorder %s28, 1
      %p168 = por %p166, %p167
      %p170 = scmp.ne.s32.totalorder %s155, %s169
      %p171 = scmp.eq.s32.totalorder %s28, 0
      %p172 = por %p170, %p171
      %s173 = ssub.s32 %s29, %s41
      %s174 = ssub.s32 %s30, %s37
      %s175 = sor.u32 %s173, %s174
      %p176 = scmp.eq.s32.totalorder %s175, 0
      %s178 = sadd.s32 %s177, 1
      %s179 = scalar_select %p176, %s177, %s178
      %p182 = pneg %p176
      %p183 = scmp.eq.s32.totalorder %s22, 1
      %p184 = por %p182, %p183
      %p185 = scmp.ne.s32.totalorder %s177, %s180
      %p186 = scmp.eq.s32.totalorder %s22, 0
      %p187 = por %p185, %p186
      %p188 = scmp.ne.s32.totalorder %s177, %s180
      %p189 = scmp.eq.s32.totalorder %s27, 1
      %p190 = por %p188, %p189
      %p191 = scmp.ne.s32.totalorder %s180, %s181
      %p192 = scmp.eq.s32.totalorder %s27, 0
      %p193 = por %p191, %p192
      %p194 = scmp.ne.s32.totalorder %s180, %s181
      %p195 = scmp.eq.s32.totalorder %s28, 1
      %p196 = por %p194, %p195
      %p198 = scmp.ne.s32.totalorder %s181, %s197
      %p199 = scmp.eq.s32.totalorder %s28, 0
      %p200 = por %p198, %p199
      %p201 = scmp.le.s32.totalorder 1, %s22
      %p202 = scmp.lt.s32.totalorder %s22, 3
      %p203 = pnand %p201, %p202
      %p204 = pneg %p203
      // Predicated region
      $region9: #{tpu_custom_call.1} parent=5 // pred_check
        _
      $region10: #{tpu_custom_call.1} parent=5 // pred_check_branch
        %206 = sbr.rel (%p203) target = $region12
      $region11: #{tpu_custom_call.1} parent=5 // pred_region
        %s207 = ssub.s32 %s22, 1
        // Predicated region
        $region13: #{tpu_custom_call.1} parent=11 // pred_check
          %p208 = pneg %p55
        $region14: #{tpu_custom_call.1} parent=11 // pred_check_branch
          %210 = sbr.rel (%p208) target = $region16
        $region15: #{tpu_custom_call.1} parent=11 // pred_region
          %s212 = ssub.s32 16, 16
          %213 = vsyncadd [#allocation5], %s212
          %216 = dma.hbm_to_smem %s0, 16, [#allocation2], [#allocation5]
        $region16: #{tpu_custom_call.1} parent=11 // pred_fallthru
          _
        // Predicated region
        $region17: #{tpu_custom_call.1} parent=11 // pred_check
          %p217 = pneg %p76
        $region18: #{tpu_custom_call.1} parent=11 // pred_check_branch
          %219 = sbr.rel (%p217) target = $region20
        $region19: #{tpu_custom_call.1} parent=11 // pred_region
          %s221 = ssub.s32 16, 16
          %222 = vsyncadd [#allocation6], %s221
          %s224 = sshll.u32 %s1, 4
          %s225 = int_to_ptr.vmem [resolvable:$true] %s224
          %227 = dma.vmem_to_smem %s225, 16, [#allocation7], [#allocation6]
        $region20: #{tpu_custom_call.1} parent=11 // pred_fallthru
          _
        // Predicated region
        $region21: #{tpu_custom_call.1} parent=11 // pred_check
          %p228 = pneg %p97
        $region22: #{tpu_custom_call.1} parent=11 // pred_check_branch
          %230 = sbr.rel (%p228) target = $region24
        $region23: #{tpu_custom_call.1} parent=11 // pred_region
          %s232 = ssub.s32 16, 16
          %233 = vsyncadd [#allocation9], %s232
          %s235 = sshll.u32 %s2, 4
          %s236 = int_to_ptr.vmem [resolvable:$true] %s235
          %238 = dma.vmem_to_smem %s236, 16, [#allocation8], [#allocation9]
        $region24: #{tpu_custom_call.1} parent=11 // pred_fallthru
          _
        // Predicated region
        $region25: #{tpu_custom_call.1} parent=11 // pred_check
          %p239 = pneg %p144
        $region26: #{tpu_custom_call.1} parent=11 // pred_check_branch
          %241 = sbr.rel (%p239) target = $region28
        $region27: #{tpu_custom_call.1} parent=11 // pred_region
          %s243 = ssub.s32 2048, 2048
          %244 = vsyncadd [#allocation12], %s243
          %s245 = sshll.u32 [#allocation11], 4
          %s246 = int_to_ptr.vmem [resolvable:$true] %s245
          %251 = dma.hbm_to_vmem [thread:$0]  %s4, 2048, %s246, [#allocation12], 128, 128, 8
        $region28: #{tpu_custom_call.1} parent=11 // pred_fallthru
          _
        // Predicated region
        $region29: #{tpu_custom_call.1} parent=11 // pred_check
          %p252 = pneg %p165
        $region30: #{tpu_custom_call.1} parent=11 // pred_check_branch
          %254 = sbr.rel (%p252) target = $region32
        $region31: #{tpu_custom_call.1} parent=11 // pred_region
          _
        $region32: #{tpu_custom_call.1} parent=11 // pred_fallthru
          _
      $region12: #{tpu_custom_call.1} parent=5 // pred_fallthru
        _
      %p255 = scmp.lt.s32.totalorder %s22, 2
      // Predicated region
      $region33: #{tpu_custom_call.1} parent=5 // pred_check
        %p256 = pneg %p255
      $region34: #{tpu_custom_call.1} parent=5 // pred_check_branch
        %258 = sbr.rel (%p256) target = $region36
      $region35: #{tpu_custom_call.1} parent=5 // pred_region
        // Predicated region
        $region37: #{tpu_custom_call.1} parent=35 // pred_check
          %p259 = pneg %p117
        $region38: #{tpu_custom_call.1} parent=35 // pred_check_branch
          %261 = sbr.rel (%p259) target = $region40
        $region39: #{tpu_custom_call.1} parent=35 // pred_region
          %s262 = sand.u32 %s107, 1
          %s263 = scalar_lea.sflag [#allocation3], %s262
          %s264 = sand.u32 %s107, 1
          %s265 = smul.addr %s264, 8
          %s266 = scalar_lea.vmem [#allocation10], %s265
          %s268 = ssub.s32 128, 128
          %269 = vsyncadd %s263, %s268
          %s270 = smul.addr %s29, 128
          %s271 = scalar_lea.hbm %s3, %s270
          %s273 = sshll.u32 %s266, 4
          %s274 = int_to_ptr.vmem [resolvable:$true] %s273
          %276 = dma.hbm_to_vmem [thread:$0]  %s271, 128, %s274, %s263
        $region40: #{tpu_custom_call.1} parent=35 // pred_fallthru
          _
      $region36: #{tpu_custom_call.1} parent=5 // pred_fallthru
        _
      %p277 = scmp.le.s32.totalorder 1, %s22
      %p278 = scmp.lt.s32.totalorder %s22, 3
      %p279 = pnand %p277, %p278
      %p280 = pneg %p279
      // Predicated region
      $region41: #{tpu_custom_call.1} parent=5 // pred_check
        _
      $region42: #{tpu_custom_call.1} parent=5 // pred_check_branch
        %282 = sbr.rel (%p279) target = $region44
      $region43: #{tpu_custom_call.1} parent=5 // pred_region
        %s283 = ssub.s32 %s22, 1
        // Predicated region
        $region45: #{tpu_custom_call.1} parent=43 // pred_check
          %p284 = pneg %p55
        $region46: #{tpu_custom_call.1} parent=43 // pred_check_branch
          %286 = sbr.rel (%p284) target = $region48
        $region47: #{tpu_custom_call.1} parent=43 // pred_region
          %287 = dma.done [#allocation5], 16
        $region48: #{tpu_custom_call.1} parent=43 // pred_fallthru
          _
        // Predicated region
        $region49: #{tpu_custom_call.1} parent=43 // pred_check
          %p288 = pneg %p76
        $region50: #{tpu_custom_call.1} parent=43 // pred_check_branch
          %290 = sbr.rel (%p288) target = $region52
        $region51: #{tpu_custom_call.1} parent=43 // pred_region
          %291 = dma.done [#allocation6], 16
        $region52: #{tpu_custom_call.1} parent=43 // pred_fallthru
          _
        // Predicated region
        $region53: #{tpu_custom_call.1} parent=43 // pred_check
          %p292 = pneg %p97
        $region54: #{tpu_custom_call.1} parent=43 // pred_check_branch
          %294 = sbr.rel (%p292) target = $region56
        $region55: #{tpu_custom_call.1} parent=43 // pred_region
          %295 = dma.done [#allocation9], 16
        $region56: #{tpu_custom_call.1} parent=43 // pred_fallthru
          _
        %s296 = sand.u32 %s110, 1
        %s297 = scalar_lea.sflag [#allocation3], %s296
        %s298 = sand.u32 %s110, 1
        %s299 = smul.addr %s298, 8
        %s300 = scalar_lea.vmem [#allocation10], %s299
        // Predicated region
        $region57: #{tpu_custom_call.1} parent=43 // pred_check
          %p301 = pneg %p123
        $region58: #{tpu_custom_call.1} parent=43 // pred_check_branch
          %303 = sbr.rel (%p301) target = $region60
        $region59: #{tpu_custom_call.1} parent=43 // pred_region
          %304 = dma.done %s297, 128
        $region60: #{tpu_custom_call.1} parent=43 // pred_fallthru
          _
        // Predicated region
        $region61: #{tpu_custom_call.1} parent=43 // pred_check
          %p305 = pneg %p144
        $region62: #{tpu_custom_call.1} parent=43 // pred_check_branch
          %307 = sbr.rel (%p305) target = $region64
        $region63: #{tpu_custom_call.1} parent=43 // pred_region
          %308 = dma.done [#allocation12], 2048
        $region64: #{tpu_custom_call.1} parent=43 // pred_fallthru
          _
        %309 = sfence
        %p310 = pneg %p55
        %p311 = pneg %p52
        %p312 = pneg %p76
        %p313 = pneg %p73
        %p314 = pneg %p97
        %p315 = pneg %p94
        %s316 = sand.u32 %s110, 1
        %s317 = scalar_lea.sflag [#allocation3], %s316
        %s318 = sand.u32 %s110, 1
        %s319 = smul.addr %s318, 8
        %s320 = scalar_lea.vmem [#allocation10], %s319
        %p321 = pneg %p123
        %p322 = pneg %p120
        %p323 = pneg %p144
        %p324 = pneg %p141
        %p325 = pneg %p165
        %p326 = pneg %p162
        %p327 = pneg %p193
        %p328 = pneg %p190
        %s329 = sand.u32 %s180, 1
        %s330 = scalar_lea.sflag [#allocation4], %s329
        %s331 = sand.u32 %s180, 1
        %s332 = smul.addr %s331, 8
        %s333 = scalar_lea.vmem [#allocation13], %s332
        %s334 = smul.u32 %s32, 128
        %v335 = vld [vmem:[%s300] sm:$0xff]
        %s336 = scalar_lea.vmem [#allocation11], %s334
        %v337 = vld [vmem:[%s336] sm:$0xff]
        %v338 = vld [vmem:[%s336 + $0x8] sm:$0xff]
        %v339 = vld [vmem:[%s336 + $0x10] sm:$0xff]
        %v340 = vld [vmem:[%s336 + $0x18] sm:$0xff]
        %v341 = vld [vmem:[%s336 + $0x20] sm:$0xff]
        %v342 = vld [vmem:[%s336 + $0x28] sm:$0xff]
        %v343 = vld [vmem:[%s336 + $0x30] sm:$0xff]
        %v344 = vld [vmem:[%s336 + $0x38] sm:$0xff]
        %v345 = vld [vmem:[%s336 + $0x40] sm:$0xff]
        %v346 = vld [vmem:[%s336 + $0x48] sm:$0xff]
        %v347 = vld [vmem:[%s336 + $0x50] sm:$0xff]
        %v348 = vld [vmem:[%s336 + $0x58] sm:$0xff]
        %v349 = vld [vmem:[%s336 + $0x60] sm:$0xff]
        %v350 = vld [vmem:[%s336 + $0x68] sm:$0xff]
        %v351 = vld [vmem:[%s336 + $0x70] sm:$0xff]
        %v352 = vld [vmem:[%s336 + $0x78] sm:$0xff]
        %s353 = sshra.s32 %s334, 7
        %s354 = sand.u32 %s334, 127
        %s355 = scalar_lea.vmem %s5, %s353
        %v356 = vld [vmem:[%s355] sm:$0x1]
        %v358 = vlaneseq
        %v359 = vshrl.u32 %v358, 7
        %v360 = vsub.s32 0, %v359
        %v361 = vrot.slane %v356, %v360
        %363 = vmatprep.subr.mxu0 0.0
        %364 = vmatpush1.xpose.msra.mxu0 %v352
        %365 = vmatprep.subr.mxu0 0.0
        %366 = vmatpush1.xpose.msra.mxu0 %v351
        %367 = vmatprep.subr.mxu0 0.0
        %368 = vmatpush1.xpose.msra.mxu0 %v350
        %369 = vmatprep.subr.mxu0 0.0
        %370 = vmatpush1.xpose.msra.mxu0 %v349
        %371 = vmatprep.subr.mxu0 0.0
        %372 = vmatpush1.xpose.msra.mxu0 %v348
        %373 = vmatprep.subr.mxu0 0.0
        %374 = vmatpush1.xpose.msra.mxu0 %v347
        %375 = vmatprep.subr.mxu0 0.0
        %376 = vmatpush1.xpose.msra.mxu0 %v346
        %377 = vmatprep.subr.mxu0 0.0
        %378 = vmatpush1.xpose.msra.mxu0 %v345
        %379 = vmatprep.subr.mxu0 0.0
        %380 = vmatpush1.xpose.msra.mxu0 %v344
        %381 = vmatprep.subr.mxu0 0.0
        %382 = vmatpush1.xpose.msra.mxu0 %v343
        %383 = vmatprep.subr.mxu0 0.0
        %384 = vmatpush1.xpose.msra.mxu0 %v342
        %385 = vmatprep.subr.mxu0 0.0
        %386 = vmatpush1.xpose.msra.mxu0 %v341
        %387 = vmatprep.subr.mxu0 0.0
        %388 = vmatpush1.xpose.msra.mxu0 %v340
        %389 = vmatprep.subr.mxu0 0.0
        %390 = vmatpush1.xpose.msra.mxu0 %v339
        %391 = vmatprep.subr.mxu0 0.0
        %392 = vmatpush1.xpose.msra.mxu0 %v338
        %393 = vmatprep.subr.mxu0 0.0
        %394 = vmatpush1.xpose.msra.mxu0 %v337
        %395 = vmatprep.subr.mxu0 0.0
        %396 = vmatpush2.xpose.msra.mxu0 0.0
        %397 = vmatprep.subr.mxu0 0.0
        %398 = vmatpush2.xpose.msra.mxu0 0.0
        %399 = vmatprep.subr.mxu0 0.0
        %400 = vmatpush2.xpose.msra.mxu0 0.0
        %401 = vmatprep.subr.mxu0 0.0
        %402 = vmatpush2.xpose.msra.mxu0 0.0
        %403 = vmatprep.subr.mxu0 0.0
        %404 = vmatpush2.xpose.msra.mxu0 0.0
        %405 = vmatprep.subr.mxu0 0.0
        %406 = vmatpush2.xpose.msra.mxu0 0.0
        %407 = vmatprep.subr.mxu0 0.0
        %408 = vmatpush2.xpose.msra.mxu0 0.0
        %409 = vmatprep.subr.mxu0 0.0
        %410 = vmatpush2.xpose.msra.mxu0 0.0
        %411 = vmatprep.subr.mxu0 0.0
        %412 = vmatpush2.xpose.msra.mxu0 0.0
        %413 = vmatprep.subr.mxu0 0.0
        %414 = vmatpush2.xpose.msra.mxu0 0.0
        %415 = vmatprep.subr.mxu0 0.0
        %416 = vmatpush2.xpose.msra.mxu0 0.0
        %417 = vmatprep.subr.mxu0 0.0
        %418 = vmatpush2.xpose.msra.mxu0 0.0
        %419 = vmatprep.subr.mxu0 0.0
        %420 = vmatpush2.xpose.msra.mxu0 0.0
        %421 = vmatprep.subr.mxu0 0.0
        %422 = vmatpush2.xpose.msra.mxu0 0.0
        %423 = vmatprep.subr.mxu0 0.0
        %424 = vmatpush2.xpose.msra.mxu0 0.0
        %425 = vmatprep.subr.mxu0 0.0
        %426 = vmatpush2.xpose.msra.mxu0 0.0
        %427 = vmatprep.mubr.f32.mxu0 0.0
        %428 = vmatmul.mubr.f32.gmra.mxu0 %v335
        %v429 = vpop.f32.mrf.mxu0
        %v430 = vadd.f32 %v361, %v429
        %v431 = vpop.f32.mrf.mxu0
        %432 = vdwg.mxu0
        %s433 = sld [smem:[#allocation2]]
        %s434 = sld [smem:[#allocation2 + $0x1]]
        %s435 = sld [smem:[#allocation2 + $0x2]]
        %s436 = sld [smem:[#allocation2 + $0x3]]
        %s437 = sld [smem:[#allocation2 + $0x4]]
        %s438 = sld [smem:[#allocation7]]
        %s439 = sld [smem:[#allocation7 + $0x1]]
        %s440 = sld [smem:[#allocation7 + $0x2]]
        %s441 = sld [smem:[#allocation7 + $0x3]]
        %s442 = sld [smem:[#allocation7 + $0x4]]
        %s443 = sld [smem:[#allocation8]]
        %s444 = sld [smem:[#allocation8 + $0x1]]
        %s445 = sld [smem:[#allocation8 + $0x2]]
        %s446 = sld [smem:[#allocation8 + $0x3]]
        %s447 = sld [smem:[#allocation8 + $0x4]]
        %v448 = vstv %s433
        %v449 = vmul.f32 %v448, %v430
        %v450 = vstv %s438
        %v451 = vadd.f32 %v449, %v450
        %v452 = vand.u32 2147483647, %v451
        %vm453 = vcmp.le.f32.partialorder %v452, 0.7853982
        %vm454 = vcmp.lt.s32.totalorder %v451, 0
        %v455 = vand.u32 %v451, 2139095040
        %v456 = vshrl.u32 %v455, 23
        %v457 = vsub.s32 %v456, 127
        %v458 = vand.u32 2147483647, %v451
        %v459 = vand.u32 %v458, 8388607
        %v460 = vor.u32 %v459, 8388608
        %v461 = vsub.s32 0, %v460
        %v462 = vadd.s32 %v457, 1
        %vm463 = vcmp.gt.s32.totalorder %v462, 0
        %v464 = vsel %vm463, %v462, 0
        %v465 = vshrl.u32 %v464, 5
        %v466 = vand.u32 %v464, 31
        %v467 = vsub.s32 32, %v466
        %v468 = vshrl.u32 683565275, %v467
        %v469 = vshll.u32 683565275, %v466
        %v470 = vshrl.u32 2475754826, %v467
        %v471 = vor.u32 %v469, %v470
        %v472 = vshll.u32 2475754826, %v466
        %v473 = vshrl.u32 2131351028, %v467
        %v474 = vor.u32 %v472, %v473
        %v475 = vshll.u32 2131351028, %v466
        %v476 = vshrl.u32 2102212464, %v467
        %v477 = vor.u32 %v475, %v476
        %v478 = vshll.u32 2102212464, %v466
        %v479 = vshrl.u32 920167782, %v467
        %v480 = vor.u32 %v478, %v479
        %v481 = vshll.u32 920167782, %v466
        %v482 = vshrl.u32 1326507024, %v467
        %v483 = vor.u32 %v481, %v482
        %vm484 = vcmp.lt.s32.totalorder %v465, 1
        %vm485 = vcmp.lt.s32.totalorder %v465, 2
        %vm486 = vcmp.lt.s32.totalorder %v465, 3
        %vm487 = vcmp.lt.s32.totalorder %v465, 4
        %v488 = vsel %vm484, %v468, %v471
        %v489 = vsel %vm487, %v477, 2102212464
        %v490 = vsel %vm486, %v474, %v489
        %v491 = vsel %vm485, %v488, %v490
        %v492 = vsel %vm484, %v471, %v474
        %v493 = vsel %vm487, %v480, 920167782
        %v494 = vsel %vm486, %v477, %v493
        %v495 = vsel %vm485, %v492, %v494
        %v496 = vsel %vm484, %v474, %v477
        %v497 = vsel %vm487, %v483, 1326507024
        %v498 = vsel %vm486, %v480, %v497
        %v499 = vsel %vm485, %v496, %v498
        %v500 = vshll.u32 %v460, 8
        %v501 = vmul.u32.u64.compose %v500, %v499
        %v502 = vextract.low.u32 %v501
        %v503 = vextract.high.u32 %v501
        %v504 = vmul.u32.u64.compose %v500, %v495
        %v505 = vextract.low.u32 %v504
        %v506 = vextract.high.u32 %v504
        %v507 = vmul.u32 %v500, %v491
        %v508 = vadd.s32 %v503, %v505
        %vm509 = vc.u32 %v503, %v505
        %v510 = vadd.s32 %v506, 1
        %v511 = vsel %vm509, %v510, %v506
        %v512 = vadd.s32 %v507, %v511
        %v513 = vadd.s32 %v512, 536870912
        %v514 = vshrl.u32 %v513, 30
        %v515 = vshll.u32 %v514, 30
        %v516 = vsub.s32 %v512, %v515
        %vm517 = vcmp.lt.s32.totalorder %v516, 0
        %v518 = vsub.s32 0, %v516
        %v519 = vsel %vm517, %v518, %v516
        %v520 = vclz %v519
        %v521 = vsub.s32 %v520, 2
        %vm522 = vcmp.gt.s32.totalorder 0, %v521
        %v523 = vsel %vm522, 0, %v521
        %v524 = vsub.s32 32, %v523
        %v525 = vshll.u32 %v516, %v523
        %v526 = vshrl.u32 %v508, %v524
        %v527 = vor.u32 %v525, %v526
        %v528 = vsub.s32 4294967266, %v523
        %v529 = vadd.s32 %v528, 127
        %v530 = vshll.u32 %v529, 23
        %v531 = vor.u32 4788187, %v530
        %v532 = vand.u32 2147483647, %v531
        %v534 = vcvt.s32.f32 %v527
        %v535 = vmul.f32 %v534, %v532
        %v536 = vxor.u32 %v535, 2147483648
        %v537 = vsel %vm454, %v536, %v535
        %v538 = vsub.s32 4, %v514
        %v539 = vsel %vm454, %v538, %v514
        %v540 = vsel %vm453, %v451, %v537
        %v541 = vsel %vm453, 0, %v539
        %v542 = vcosq.f32.pop %v540
        %v543 = vsinq.f32.pop %v540
        %vm544 = vweird.f32 %v451
        %v545 = vadd.s32 %v541, 3
        %v546 = vand.u32 %v545, 3
        %vm547 = vcmp.lt.s32.totalorder %v546, 2
        %vm548 = vcmp.eq.s32.totalorder %v546, 0
        %v549 = vxor.u32 %v543, 2147483648
        %v550 = vsel %vm548, %v542, %v549
        %vm551 = vcmp.eq.s32.totalorder %v546, 2
        %v552 = vxor.u32 %v542, 2147483648
        %v553 = vsel %vm551, %v552, %v543
        %v554 = vsel %vm547, %v550, %v553
        %v555 = vsel %vm544, nan, %v554
        %v556 = vstv %s443
        %v557 = vmul.f32 %v556, %v555
        %v558 = vstv %s434
        %v559 = vmul.f32 %v558, %v430
        %v560 = vstv %s439
        %v561 = vadd.f32 %v559, %v560
        %v562 = vand.u32 2147483647, %v561
        %vm563 = vcmp.le.f32.partialorder %v562, 0.7853982
        %vm564 = vcmp.lt.s32.totalorder %v561, 0
        %v565 = vand.u32 %v561, 2139095040
        %v566 = vshrl.u32 %v565, 23
        %v567 = vsub.s32 %v566, 127
        %v568 = vand.u32 2147483647, %v561
        %v569 = vand.u32 %v568, 8388607
        %v570 = vor.u32 %v569, 8388608
        %v571 = vsub.s32 0, %v570
        %v572 = vadd.s32 %v567, 1
        %vm573 = vcmp.gt.s32.totalorder %v572, 0
        %v574 = vsel %vm573, %v572, 0
        %v575 = vshrl.u32 %v574, 5
        %v576 = vand.u32 %v574, 31
        %v577 = vsub.s32 32, %v576
        %v578 = vshrl.u32 683565275, %v577
        %v579 = vshll.u32 683565275, %v576
        %v580 = vshrl.u32 2475754826, %v577
        %v581 = vor.u32 %v579, %v580
        %v582 = vshll.u32 2475754826, %v576
        %v583 = vshrl.u32 2131351028, %v577
        %v584 = vor.u32 %v582, %v583
        %v585 = vshll.u32 2131351028, %v576
        %v586 = vshrl.u32 2102212464, %v577
        %v587 = vor.u32 %v585, %v586
        %v588 = vshll.u32 2102212464, %v576
        %v589 = vshrl.u32 920167782, %v577
        %v590 = vor.u32 %v588, %v589
        %v591 = vshll.u32 920167782, %v576
        %v592 = vshrl.u32 1326507024, %v577
        %v593 = vor.u32 %v591, %v592
        %vm594 = vcmp.lt.s32.totalorder %v575, 1
        %vm595 = vcmp.lt.s32.totalorder %v575, 2
        %vm596 = vcmp.lt.s32.totalorder %v575, 3
        %vm597 = vcmp.lt.s32.totalorder %v575, 4
        %v598 = vsel %vm594, %v578, %v581
        %v599 = vsel %vm597, %v587, 2102212464
        %v600 = vsel %vm596, %v584, %v599
        %v601 = vsel %vm595, %v598, %v600
        %v602 = vsel %vm594, %v581, %v584
        %v603 = vsel %vm597, %v590, 920167782
        %v604 = vsel %vm596, %v587, %v603
        %v605 = vsel %vm595, %v602, %v604
        %v606 = vsel %vm594, %v584, %v587
        %v607 = vsel %vm597, %v593, 1326507024
        %v608 = vsel %vm596, %v590, %v607
        %v609 = vsel %vm595, %v606, %v608
        %v610 = vshll.u32 %v570, 8
        %v611 = vmul.u32.u64.compose %v610, %v609
        %v612 = vextract.low.u32 %v611
        %v613 = vextract.high.u32 %v611
        %v614 = vmul.u32.u64.compose %v610, %v605
        %v615 = vextract.low.u32 %v614
        %v616 = vextract.high.u32 %v614
        %v617 = vmul.u32 %v610, %v601
        %v618 = vadd.s32 %v613, %v615
        %vm619 = vc.u32 %v613, %v615
        %v620 = vadd.s32 %v616, 1
        %v621 = vsel %vm619, %v620, %v616
        %v622 = vadd.s32 %v617, %v621
        %v623 = vadd.s32 %v622, 536870912
        %v624 = vshrl.u32 %v623, 30
        %v625 = vshll.u32 %v624, 30
        %v626 = vsub.s32 %v622, %v625
        %vm627 = vcmp.lt.s32.totalorder %v626, 0
        %v628 = vsub.s32 0, %v626
        %v629 = vsel %vm627, %v628, %v626
        %v630 = vclz %v629
        %v631 = vsub.s32 %v630, 2
        %vm632 = vcmp.gt.s32.totalorder 0, %v631
        %v633 = vsel %vm632, 0, %v631
        %v634 = vsub.s32 32, %v633
        %v635 = vshll.u32 %v626, %v633
        %v636 = vshrl.u32 %v618, %v634
        %v637 = vor.u32 %v635, %v636
        %v638 = vsub.s32 4294967266, %v633
        %v639 = vadd.s32 %v638, 127
        %v640 = vshll.u32 %v639, 23
        %v641 = vor.u32 4788187, %v640
        %v642 = vand.u32 2147483647, %v641
        %v644 = vcvt.s32.f32 %v637
        %v645 = vmul.f32 %v644, %v642
        %v646 = vxor.u32 %v645, 2147483648
        %v647 = vsel %vm564, %v646, %v645
        %v648 = vsub.s32 4, %v624
        %v649 = vsel %vm564, %v648, %v624
        %v650 = vsel %vm563, %v561, %v647
        %v651 = vsel %vm563, 0, %v649
        %v652 = vcosq.f32.pop %v650
        %v653 = vsinq.f32.pop %v650
        %vm654 = vweird.f32 %v561
        %v655 = vadd.s32 %v651, 3
        %v656 = vand.u32 %v655, 3
        %vm657 = vcmp.lt.s32.totalorder %v656, 2
        %vm658 = vcmp.eq.s32.totalorder %v656, 0
        %v659 = vxor.u32 %v653, 2147483648
        %v660 = vsel %vm658, %v652, %v659
        %vm661 = vcmp.eq.s32.totalorder %v656, 2
        %v662 = vxor.u32 %v652, 2147483648
        %v663 = vsel %vm661, %v662, %v653
        %v664 = vsel %vm657, %v660, %v663
        %v665 = vsel %vm654, nan, %v664
        %v666 = vstv %s444
        %v667 = vmul.f32 %v666, %v665
        %v668 = vadd.f32 %v557, %v667
        %v669 = vstv %s435
        %v670 = vmul.f32 %v669, %v430
        %v671 = vstv %s440
        %v672 = vadd.f32 %v670, %v671
        %v673 = vand.u32 2147483647, %v672
        %vm674 = vcmp.le.f32.partialorder %v673, 0.7853982
        %vm675 = vcmp.lt.s32.totalorder %v672, 0
        %v676 = vand.u32 %v672, 2139095040
        %v677 = vshrl.u32 %v676, 23
        %v678 = vsub.s32 %v677, 127
        %v679 = vand.u32 2147483647, %v672
        %v680 = vand.u32 %v679, 8388607
        %v681 = vor.u32 %v680, 8388608
        %v682 = vsub.s32 0, %v681
        %v683 = vadd.s32 %v678, 1
        %vm684 = vcmp.gt.s32.totalorder %v683, 0
        %v685 = vsel %vm684, %v683, 0
        %v686 = vshrl.u32 %v685, 5
        %v687 = vand.u32 %v685, 31
        %v688 = vsub.s32 32, %v687
        %v689 = vshrl.u32 683565275, %v688
        %v690 = vshll.u32 683565275, %v687
        %v691 = vshrl.u32 2475754826, %v688
        %v692 = vor.u32 %v690, %v691
        %v693 = vshll.u32 2475754826, %v687
        %v694 = vshrl.u32 2131351028, %v688
        %v695 = vor.u32 %v693, %v694
        %v696 = vshll.u32 2131351028, %v687
        %v697 = vshrl.u32 2102212464, %v688
        %v698 = vor.u32 %v696, %v697
        %v699 = vshll.u32 2102212464, %v687
        %v700 = vshrl.u32 920167782, %v688
        %v701 = vor.u32 %v699, %v700
        %v702 = vshll.u32 920167782, %v687
        %v703 = vshrl.u32 1326507024, %v688
        %v704 = vor.u32 %v702, %v703
        %vm705 = vcmp.lt.s32.totalorder %v686, 1
        %vm706 = vcmp.lt.s32.totalorder %v686, 2
        %vm707 = vcmp.lt.s32.totalorder %v686, 3
        %vm708 = vcmp.lt.s32.totalorder %v686, 4
        %v709 = vsel %vm705, %v689, %v692
        %v710 = vsel %vm708, %v698, 2102212464
        %v711 = vsel %vm707, %v695, %v710
        %v712 = vsel %vm706, %v709, %v711
        %v713 = vsel %vm705, %v692, %v695
        %v714 = vsel %vm708, %v701, 920167782
        %v715 = vsel %vm707, %v698, %v714
        %v716 = vsel %vm706, %v713, %v715
        %v717 = vsel %vm705, %v695, %v698
        %v718 = vsel %vm708, %v704, 1326507024
        %v719 = vsel %vm707, %v701, %v718
        %v720 = vsel %vm706, %v717, %v719
        %v721 = vshll.u32 %v681, 8
        %v722 = vmul.u32.u64.compose %v721, %v720
        %v723 = vextract.low.u32 %v722
        %v724 = vextract.high.u32 %v722
        %v725 = vmul.u32.u64.compose %v721, %v716
        %v726 = vextract.low.u32 %v725
        %v727 = vextract.high.u32 %v725
        %v728 = vmul.u32 %v721, %v712
        %v729 = vadd.s32 %v724, %v726
        %vm730 = vc.u32 %v724, %v726
        %v731 = vadd.s32 %v727, 1
        %v732 = vsel %vm730, %v731, %v727
        %v733 = vadd.s32 %v728, %v732
        %v734 = vadd.s32 %v733, 536870912
        %v735 = vshrl.u32 %v734, 30
        %v736 = vshll.u32 %v735, 30
        %v737 = vsub.s32 %v733, %v736
        %vm738 = vcmp.lt.s32.totalorder %v737, 0
        %v739 = vsub.s32 0, %v737
        %v740 = vsel %vm738, %v739, %v737
        %v741 = vclz %v740
        %v742 = vsub.s32 %v741, 2
        %vm743 = vcmp.gt.s32.totalorder 0, %v742
        %v744 = vsel %vm743, 0, %v742
        %v745 = vsub.s32 32, %v744
        %v746 = vshll.u32 %v737, %v744
        %v747 = vshrl.u32 %v729, %v745
        %v748 = vor.u32 %v746, %v747
        %v749 = vsub.s32 4294967266, %v744
        %v750 = vadd.s32 %v749, 127
        %v751 = vshll.u32 %v750, 23
        %v752 = vor.u32 4788187, %v751
        %v753 = vand.u32 2147483647, %v752
        %v755 = vcvt.s32.f32 %v748
        %v756 = vmul.f32 %v755, %v753
        %v757 = vxor.u32 %v756, 2147483648
        %v758 = vsel %vm675, %v757, %v756
        %v759 = vsub.s32 4, %v735
        %v760 = vsel %vm675, %v759, %v735
        %v761 = vsel %vm674, %v672, %v758
        %v762 = vsel %vm674, 0, %v760
        %v763 = vcosq.f32.pop %v761
        %v764 = vsinq.f32.pop %v761
        %vm765 = vweird.f32 %v672
        %v766 = vadd.s32 %v762, 3
        %v767 = vand.u32 %v766, 3
        %vm768 = vcmp.lt.s32.totalorder %v767, 2
        %vm769 = vcmp.eq.s32.totalorder %v767, 0
        %v770 = vxor.u32 %v764, 2147483648
        %v771 = vsel %vm769, %v763, %v770
        %vm772 = vcmp.eq.s32.totalorder %v767, 2
        %v773 = vxor.u32 %v763, 2147483648
        %v774 = vsel %vm772, %v773, %v764
        %v775 = vsel %vm768, %v771, %v774
        %v776 = vsel %vm765, nan, %v775
        %v777 = vstv %s445
        %v778 = vmul.f32 %v777, %v776
        %v779 = vadd.f32 %v668, %v778
        %v780 = vstv %s436
        %v781 = vmul.f32 %v780, %v430
        %v782 = vstv %s441
        %v783 = vadd.f32 %v781, %v782
        %v784 = vand.u32 2147483647, %v783
        %vm785 = vcmp.le.f32.partialorder %v784, 0.7853982
        %vm786 = vcmp.lt.s32.totalorder %v783, 0
        %v787 = vand.u32 %v783, 2139095040
        %v788 = vshrl.u32 %v787, 23
        %v789 = vsub.s32 %v788, 127
        %v790 = vand.u32 2147483647, %v783
        %v791 = vand.u32 %v790, 8388607
        %v792 = vor.u32 %v791, 8388608
        %v793 = vsub.s32 0, %v792
        %v794 = vadd.s32 %v789, 1
        %vm795 = vcmp.gt.s32.totalorder %v794, 0
        %v796 = vsel %vm795, %v794, 0
        %v797 = vshrl.u32 %v796, 5
        %v798 = vand.u32 %v796, 31
        %v799 = vsub.s32 32, %v798
        %v800 = vshrl.u32 683565275, %v799
        %v801 = vshll.u32 683565275, %v798
        %v802 = vshrl.u32 2475754826, %v799
        %v803 = vor.u32 %v801, %v802
        %v804 = vshll.u32 2475754826, %v798
        %v805 = vshrl.u32 2131351028, %v799
        %v806 = vor.u32 %v804, %v805
        %v807 = vshll.u32 2131351028, %v798
        %v808 = vshrl.u32 2102212464, %v799
        %v809 = vor.u32 %v807, %v808
        %v810 = vshll.u32 2102212464, %v798
        %v811 = vshrl.u32 920167782, %v799
        %v812 = vor.u32 %v810, %v811
        %v813 = vshll.u32 920167782, %v798
        %v814 = vshrl.u32 1326507024, %v799
        %v815 = vor.u32 %v813, %v814
        %vm816 = vcmp.lt.s32.totalorder %v797, 1
        %vm817 = vcmp.lt.s32.totalorder %v797, 2
        %vm818 = vcmp.lt.s32.totalorder %v797, 3
        %vm819 = vcmp.lt.s32.totalorder %v797, 4
        %v820 = vsel %vm816, %v800, %v803
        %v821 = vsel %vm819, %v809, 2102212464
        %v822 = vsel %vm818, %v806, %v821
        %v823 = vsel %vm817, %v820, %v822
        %v824 = vsel %vm816, %v803, %v806
        %v825 = vsel %vm819, %v812, 920167782
        %v826 = vsel %vm818, %v809, %v825
        %v827 = vsel %vm817, %v824, %v826
        %v828 = vsel %vm816, %v806, %v809
        %v829 = vsel %vm819, %v815, 1326507024
        %v830 = vsel %vm818, %v812, %v829
        %v831 = vsel %vm817, %v828, %v830
        %v832 = vshll.u32 %v792, 8
        %v833 = vmul.u32.u64.compose %v832, %v831
        %v834 = vextract.low.u32 %v833
        %v835 = vextract.high.u32 %v833
        %v836 = vmul.u32.u64.compose %v832, %v827
        %v837 = vextract.low.u32 %v836
        %v838 = vextract.high.u32 %v836
        %v839 = vmul.u32 %v832, %v823
        %v840 = vadd.s32 %v835, %v837
        %vm841 = vc.u32 %v835, %v837
        %v842 = vadd.s32 %v838, 1
        %v843 = vsel %vm841, %v842, %v838
        %v844 = vadd.s32 %v839, %v843
        %v845 = vadd.s32 %v844, 536870912
        %v846 = vshrl.u32 %v845, 30
        %v847 = vshll.u32 %v846, 30
        %v848 = vsub.s32 %v844, %v847
        %vm849 = vcmp.lt.s32.totalorder %v848, 0
        %v850 = vsub.s32 0, %v848
        %v851 = vsel %vm849, %v850, %v848
        %v852 = vclz %v851
        %v853 = vsub.s32 %v852, 2
        %vm854 = vcmp.gt.s32.totalorder 0, %v853
        %v855 = vsel %vm854, 0, %v853
        %v856 = vsub.s32 32, %v855
        %v857 = vshll.u32 %v848, %v855
        %v858 = vshrl.u32 %v840, %v856
        %v859 = vor.u32 %v857, %v858
        %v860 = vsub.s32 4294967266, %v855
        %v861 = vadd.s32 %v860, 127
        %v862 = vshll.u32 %v861, 23
        %v863 = vor.u32 4788187, %v862
        %v864 = vand.u32 2147483647, %v863
        %v866 = vcvt.s32.f32 %v859
        %v867 = vmul.f32 %v866, %v864
        %v868 = vxor.u32 %v867, 2147483648
        %v869 = vsel %vm786, %v868, %v867
        %v870 = vsub.s32 4, %v846
        %v871 = vsel %vm786, %v870, %v846
        %v872 = vsel %vm785, %v783, %v869
        %v873 = vsel %vm785, 0, %v871
        %v874 = vcosq.f32.pop %v872
        %v875 = vsinq.f32.pop %v872
        %vm876 = vweird.f32 %v783
        %v877 = vadd.s32 %v873, 3
        %v878 = vand.u32 %v877, 3
        %vm879 = vcmp.lt.s32.totalorder %v878, 2
        %vm880 = vcmp.eq.s32.totalorder %v878, 0
        %v881 = vxor.u32 %v875, 2147483648
        %v882 = vsel %vm880, %v874, %v881
        %vm883 = vcmp.eq.s32.totalorder %v878, 2
        %v884 = vxor.u32 %v874, 2147483648
        %v885 = vsel %vm883, %v884, %v875
        %v886 = vsel %vm879, %v882, %v885
        %v887 = vsel %vm876, nan, %v886
        %v888 = vstv %s446
        %v889 = vmul.f32 %v888, %v887
        %v890 = vadd.f32 %v779, %v889
        %v891 = vstv %s437
        %v892 = vmul.f32 %v891, %v430
        %v893 = vstv %s442
        %v894 = vadd.f32 %v892, %v893
        %v895 = vand.u32 2147483647, %v894
        %vm896 = vcmp.le.f32.partialorder %v895, 0.7853982
        %vm897 = vcmp.lt.s32.totalorder %v894, 0
        %v898 = vand.u32 %v894, 2139095040
        %v899 = vshrl.u32 %v898, 23
        %v900 = vsub.s32 %v899, 127
        %v901 = vand.u32 2147483647, %v894
        %v902 = vand.u32 %v901, 8388607
        %v903 = vor.u32 %v902, 8388608
        %v904 = vsub.s32 0, %v903
        %v905 = vadd.s32 %v900, 1
        %vm906 = vcmp.gt.s32.totalorder %v905, 0
        %v907 = vsel %vm906, %v905, 0
        %v908 = vshrl.u32 %v907, 5
        %v909 = vand.u32 %v907, 31
        %v910 = vsub.s32 32, %v909
        %v911 = vshrl.u32 683565275, %v910
        %v912 = vshll.u32 683565275, %v909
        %v913 = vshrl.u32 2475754826, %v910
        %v914 = vor.u32 %v912, %v913
        %v915 = vshll.u32 2475754826, %v909
        %v916 = vshrl.u32 2131351028, %v910
        %v917 = vor.u32 %v915, %v916
        %v918 = vshll.u32 2131351028, %v909
        %v919 = vshrl.u32 2102212464, %v910
        %v920 = vor.u32 %v918, %v919
        %v921 = vshll.u32 2102212464, %v909
        %v922 = vshrl.u32 920167782, %v910
        %v923 = vor.u32 %v921, %v922
        %v924 = vshll.u32 920167782, %v909
        %v925 = vshrl.u32 1326507024, %v910
        %v926 = vor.u32 %v924, %v925
        %vm927 = vcmp.lt.s32.totalorder %v908, 1
        %vm928 = vcmp.lt.s32.totalorder %v908, 2
        %vm929 = vcmp.lt.s32.totalorder %v908, 3
        %vm930 = vcmp.lt.s32.totalorder %v908, 4
        %v931 = vsel %vm927, %v911, %v914
        %v932 = vsel %vm930, %v920, 2102212464
        %v933 = vsel %vm929, %v917, %v932
        %v934 = vsel %vm928, %v931, %v933
        %v935 = vsel %vm927, %v914, %v917
        %v936 = vsel %vm930, %v923, 920167782
        %v937 = vsel %vm929, %v920, %v936
        %v938 = vsel %vm928, %v935, %v937
        %v939 = vsel %vm927, %v917, %v920
        %v940 = vsel %vm930, %v926, 1326507024
        %v941 = vsel %vm929, %v923, %v940
        %v942 = vsel %vm928, %v939, %v941
        %v943 = vshll.u32 %v903, 8
        %v944 = vmul.u32.u64.compose %v943, %v942
        %v945 = vextract.low.u32 %v944
        %v946 = vextract.high.u32 %v944
        %v947 = vmul.u32.u64.compose %v943, %v938
        %v948 = vextract.low.u32 %v947
        %v949 = vextract.high.u32 %v947
        %v950 = vmul.u32 %v943, %v934
        %v951 = vadd.s32 %v946, %v948
        %vm952 = vc.u32 %v946, %v948
        %v953 = vadd.s32 %v949, 1
        %v954 = vsel %vm952, %v953, %v949
        %v955 = vadd.s32 %v950, %v954
        %v956 = vadd.s32 %v955, 536870912
        %v957 = vshrl.u32 %v956, 30
        %v958 = vshll.u32 %v957, 30
        %v959 = vsub.s32 %v955, %v958
        %vm960 = vcmp.lt.s32.totalorder %v959, 0
        %v961 = vsub.s32 0, %v959
        %v962 = vsel %vm960, %v961, %v959
        %v963 = vclz %v962
        %v964 = vsub.s32 %v963, 2
        %vm965 = vcmp.gt.s32.totalorder 0, %v964
        %v966 = vsel %vm965, 0, %v964
        %v967 = vsub.s32 32, %v966
        %v968 = vshll.u32 %v959, %v966
        %v969 = vshrl.u32 %v951, %v967
        %v970 = vor.u32 %v968, %v969
        %v971 = vsub.s32 4294967266, %v966
        %v972 = vadd.s32 %v971, 127
        %v973 = vshll.u32 %v972, 23
        %v974 = vor.u32 4788187, %v973
        %v975 = vand.u32 2147483647, %v974
        %v977 = vcvt.s32.f32 %v970
        %v978 = vmul.f32 %v977, %v975
        %v979 = vxor.u32 %v978, 2147483648
        %v980 = vsel %vm897, %v979, %v978
        %v981 = vsub.s32 4, %v957
        %v982 = vsel %vm897, %v981, %v957
        %v983 = vsel %vm896, %v894, %v980
        %v984 = vsel %vm896, 0, %v982
        %v985 = vcosq.f32.pop %v983
        %v986 = vsinq.f32.pop %v983
        %vm987 = vweird.f32 %v894
        %v988 = vadd.s32 %v984, 3
        %v989 = vand.u32 %v988, 3
        %vm990 = vcmp.lt.s32.totalorder %v989, 2
        %vm991 = vcmp.eq.s32.totalorder %v989, 0
        %v992 = vxor.u32 %v986, 2147483648
        %v993 = vsel %vm991, %v985, %v992
        %vm994 = vcmp.eq.s32.totalorder %v989, 2
        %v995 = vxor.u32 %v985, 2147483648
        %v996 = vsel %vm994, %v995, %v986
        %v997 = vsel %vm990, %v993, %v996
        %v998 = vsel %vm987, nan, %v997
        %v999 = vstv %s447
        %v1000 = vmul.f32 %v999, %v998
        %v1001 = vadd.f32 %v890, %v1000
        %s1002 = scalar_lea.vmem %s300, %s353 [#allocation10]
        %v1003 = vld [vmem:[%s1002] sm:$0xff]
        %v1004 = vadd.f32 %v1001, %v1003
        %1005 = vst [vmem:[%s333] sm:$0xff] %v1004
        %s1006 = sand.u32 %s180, 1
        %s1007 = scalar_lea.sflag [#allocation4], %s1006
        %s1008 = sand.u32 %s180, 1
        %s1009 = smul.addr %s1008, 8
        %s1010 = scalar_lea.vmem [#allocation13], %s1009
        // Predicated region
        $region65: #{tpu_custom_call.1} parent=43 // pred_check
          %p1011 = pneg %p190
        $region66: #{tpu_custom_call.1} parent=43 // pred_check_branch
          %1013 = sbr.rel (%p1011) target = $region68
        $region67: #{tpu_custom_call.1} parent=43 // pred_region
          %s1015 = ssub.s32 128, 128
          %1016 = vsyncadd %s1007, %s1015
          %s1017 = sadd.s32 %s32, %s31
          %s1018 = smul.addr %s1017, 128
          %s1019 = scalar_lea.hbm %s6, %s1018
          %s1021 = sshll.u32 %s1010, 4
          %s1022 = int_to_ptr.vmem [resolvable:$true] %s1021
          %1024 = dma.vmem_to_hbm [thread:$0]  %s1022, 128, %s1019, %s1007
        $region68: #{tpu_custom_call.1} parent=43 // pred_fallthru
          _
      $region44: #{tpu_custom_call.1} parent=5 // pred_fallthru
        _
      %p1025 = scmp.le.s32.totalorder 2, %s22
      // Predicated region
      $region69: #{tpu_custom_call.1} parent=5 // pred_check
        %p1026 = pneg %p1025
      $region70: #{tpu_custom_call.1} parent=5 // pred_check_branch
        %1028 = sbr.rel (%p1026) target = $region72
      $region71: #{tpu_custom_call.1} parent=5 // pred_region
        %s1029 = ssub.s32 %s22, 2
        // Predicated region
        $region73: #{tpu_custom_call.1} parent=71 // pred_check
          %p1030 = pneg %p196
        $region74: #{tpu_custom_call.1} parent=71 // pred_check_branch
          %1032 = sbr.rel (%p1030) target = $region76
        $region75: #{tpu_custom_call.1} parent=71 // pred_region
          %s1033 = sand.u32 %s181, 1
          %s1034 = scalar_lea.sflag [#allocation4], %s1033
          %s1035 = sand.u32 %s181, 1
          %s1036 = smul.addr %s1035, 8
          %s1037 = scalar_lea.vmem [#allocation13], %s1036
          %1038 = dma.done %s1034, 128
        $region76: #{tpu_custom_call.1} parent=71 // pred_fallthru
          _
      $region72: #{tpu_custom_call.1} parent=5 // pred_fallthru
        _
    $region6: #{tpu_custom_call.1} parent=1 // loop_footer
      %s26 = sadd.s32 1, %s22
    $region7: #{tpu_custom_call.1} parent=1 // loop_footer_branch
      %21 = sbr.rel target = $region3
    $region8: #{tpu_custom_call.1} parent=1 // loop_exit
      _
    %1039 = vsyncpa [#allocation3], 1
    %s1040 = scalar_lea.sflag [#allocation3], 1
    %1041 = vsyncpa %s1040, 1
    %1042 = vsyncpa [#allocation12], 1
    %1043 = vsyncpa [#allocation4], 1
    %s1044 = scalar_lea.sflag [#allocation4], 1
    %1045 = vsyncpa %s1044, 1
    %1046 = vsyncpa [#allocation5], 1
    %s1047 = scalar_lea.sflag [#allocation5], 1
    %1048 = vsyncpa %s1047, 1
    %1049 = vsyncpa [#allocation6], 1
    %s1050 = scalar_lea.sflag [#allocation6], 1
    %1051 = vsyncpa %s1050, 1
    %1052 = vsyncpa [#allocation9], 1

</llo_original>
